<compile_context>
chip_gen: v5e
topology: v5e:2x2
jax: 0.10.0
libtpu: 0.0.40
codegen_flags: <defaults>
</compile_context>

<pallas_src>
import functools

import jax
import jax.numpy as jnp
from jax.experimental import pallas as pl
from jax.experimental.pallas import tpu as pltpu

LN_EPS = 1e-5       # nn.LayerNorm default
_LANE = 128
_SUBLANE = 8
_VMEM_BUDGET = 48 * 1024 * 1024   # fit target for tile selection (all generations)
_VMEM_LIMIT = 56 * 1024 * 1024    # scoped limit; leaves headroom under v7x's 64 MiB/TC


def _round_up(n, m):
    return (n + m - 1) // m * m


def _vmem_bytes(rt, Dp, act_itemsize):
    """Rough per-kernel VMEM estimate used to pick the row tile."""
    act_io = (2 + 2 + 2) * rt * Dp * act_itemsize        # x, residual, out (double-buffered)
    weight = Dp * (2 * Dp) * 2                            # bf16 fused weight, Buffered(1)
    small = (2 * Dp + 2 * Dp) * 4                         # bias row + gamma/beta slab
    temps = rt * (2 * Dp) * 4 + 2 * rt * Dp * 4           # f32 fused intermediate + y/norm
    return act_io + weight + small + temps


def _gate_add_norm_kernel(x_ref, res_ref, wg_ref, bg_ref, ln_ref, o_ref, *, d_true):
    d_pad = x_ref.shape[-1]

    # Fused GLU matmul: [rt, Dp](bf16) @ [Dp, 2*Dp](bf16) on the MXU, f32 accumulate.
    # Left half feeds the sigmoid gate, right half is the linear branch.
    x_bf = x_ref[...].astype(jnp.bfloat16)
    fused = jnp.dot(x_bf, wg_ref[...],
                    preferred_element_type=jnp.float32) + bg_ref[...]
    sig = jax.nn.sigmoid(fused[:, :d_pad])
    lin = fused[:, d_pad:]

    # GLU + residual add (f32 elementwise math; padded feature columns stay exactly 0
    # because lin and residual are 0 there).
    y = sig * lin + res_ref[...].astype(jnp.float32)

    # One-pass LayerNorm statistics over the true feature width (padded columns are 0,
    # so plain row sums with a 1/d_true divisor give the unpadded statistics).
    inv_d = jnp.float32(1.0 / d_true)
    s = jnp.sum(y, axis=-1, keepdims=True)
    ss = jnp.sum(y * y, axis=-1, keepdims=True)
    mean = s * inv_d
    var = jnp.maximum(ss * inv_d - mean * mean, 0.0)
    norm = (y - mean) * jax.lax.rsqrt(var + LN_EPS)
    out = norm * ln_ref[0:1, :] + ln_ref[1:2, :]          # gamma / beta (0 in padding)

    o_ref[...] = out.astype(o_ref.dtype)


def pack_glu_layernorm_params(w1, b1, w2, b2, gamma, beta):
    """Pack GLU + LayerNorm parameters ONCE (at load time), not per forward call.

    w1/w2: [D, D] in (in, out) layout (i.e. PyTorch weight transposed).
    Returns (wg[Dp, 2*Dp] bf16, bg[1, 2*Dp] f32, ln[2, Dp] f32), feature-padded to a
    lane-dense multiple of 128 with exact zeros (required by the in-kernel LN trick).
    """
    D = w1.shape[0]
    Dp = _round_up(D, _LANE)
    if Dp != D:
        pad2 = ((0, Dp - D), (0, Dp - D))
        w1 = jnp.pad(w1, pad2)
        w2 = jnp.pad(w2, pad2)
        b1 = jnp.pad(b1, (0, Dp - D))
        b2 = jnp.pad(b2, (0, Dp - D))
        gamma = jnp.pad(gamma, (0, Dp - D))
        beta = jnp.pad(beta, (0, Dp - D))
    wg = jnp.concatenate([w1, w2], axis=1).astype(jnp.bfloat16)      # (Dp, 2*Dp)
    bg = jnp.concatenate([b1, b2]).reshape(1, 2 * Dp).astype(jnp.float32)
    ln = jnp.stack([gamma, beta]).astype(jnp.float32)                # (2, Dp)
    return wg, bg, ln


@functools.partial(jax.jit, static_argnames=("row_tile",))
def gate_add_norm(x, residual, wg, bg, ln, *, row_tile=512):
    """x, residual: [B, T, D].  wg/bg/ln: pre-packed via pack_glu_layernorm_params."""
    B, T, D = x.shape
    N = B * T
    Dp = wg.shape[0]

    x2 = x.reshape(N, D)
    r2 = residual.reshape(N, D)
    if Dp != D:
        # Feature padding must be exact zeros for the one-pass LayerNorm statistics.
        x2 = jnp.pad(x2, ((0, 0), (0, Dp - D)))
        r2 = jnp.pad(r2, ((0, 0), (0, Dp - D)))

    act_item = jnp.dtype(x.dtype).itemsize
    # Row tile: multiple of 8, at most ceil(N/2) (>= 2 grid steps so the 'parallel'
    # axis can shard across v7x's two TensorCores), shrunk to fit the VMEM budget.
    rt = _round_up(min(row_tile, max(pl.cdiv(N, 2), _SUBLANE)), _SUBLANE)
    while rt > _SUBLANE and _vmem_bytes(rt, Dp, act_item) > _VMEM_BUDGET:
        rt = _round_up(max(rt // 2, _SUBLANE), _SUBLANE)

    grid = (pl.cdiv(N, rt),)                 # partial last row-block is masked by Pallas

    row_spec = pl.BlockSpec((rt, Dp), lambda i: (i, 0))
    # Grid-invariant operands: single-buffered (no wasted second VMEM buffer).
    w_spec = pl.BlockSpec((Dp, 2 * Dp), lambda i: (0, 0), pipeline_mode=pl.Buffered(1))
    bg_spec = pl.BlockSpec((1, 2 * Dp), lambda i: (0, 0), pipeline_mode=pl.Buffered(1))
    ln_spec = pl.BlockSpec((2, Dp), lambda i: (0, 0), pipeline_mode=pl.Buffered(1))

    n_proc = grid[0] * rt                    # rows actually streamed through the pipeline
    cost = pl.CostEstimate(
        flops=2 * n_proc * Dp * (2 * Dp) + 10 * n_proc * Dp,
        transcendentals=n_proc * Dp + n_proc,               # sigmoid + per-row rsqrt
        bytes_accessed=(3 * n_proc * Dp * act_item          # x, residual, out streams
                        + wg.size * jnp.dtype(wg.dtype).itemsize
                        + (bg.size + ln.size) * 4),
    )

    out = pl.pallas_call(
        functools.partial(_gate_add_norm_kernel, d_true=D),
        out_shape=jax.ShapeDtypeStruct((N, Dp), x.dtype),
        grid=grid,
        in_specs=[row_spec, row_spec, w_spec, bg_spec, ln_spec],
        out_specs=row_spec,
        compiler_params=pltpu.CompilerParams(
            dimension_semantics=("parallel",),
            vmem_limit_bytes=_VMEM_LIMIT),
        cost_estimate=cost,
    )(x2, r2, wg, bg, ln)

    if Dp != D:
        out = out[:, :D]
    return out.reshape(B, T, D)


def _reference(x, residual, w1, b1, w2, b2, gamma, beta):
    xf = x.astype(jnp.float32)
    sig = jax.nn.sigmoid(xf @ w1 + b1)
    lin = xf @ w2 + b2
    y = sig * lin + residual.astype(jnp.float32)
    mean = jnp.mean(y, axis=-1, keepdims=True)
    var = jnp.mean((y - mean) ** 2, axis=-1, keepdims=True)
    return ((y - mean) * jax.lax.rsqrt(var + LN_EPS)) * gamma + beta


def _make_inputs(key, B, T, D):
    kx, kr, kw1, kb1, kw2, kb2 = jax.random.split(key, 6)
    x = jax.random.normal(kx, (B, T, D), dtype=jnp.float32)
    residual = jax.random.normal(kr, (B, T, D), dtype=jnp.float32)
    bound = 1.0 / (D ** 0.5)
    w1 = jax.random.uniform(kw1, (D, D), jnp.float32, -bound, bound)
    b1 = jax.random.uniform(kb1, (D,), jnp.float32, -bound, bound)
    w2 = jax.random.uniform(kw2, (D, D), jnp.float32, -bound, bound)
    b2 = jax.random.uniform(kb2, (D,), jnp.float32, -bound, bound)
    gamma = jnp.ones((D,), jnp.float32)    # nn.LayerNorm default weight
    beta = jnp.zeros((D,), jnp.float32)    # nn.LayerNorm default bias
    return x, residual, w1, b1, w2, b2, gamma, beta


def _check(args, row_tile=512, atol=2e-2, rtol=2e-2):
    # bf16 MXU operands vs the pure-f32 reference -> tolerances loosened accordingly.
    x, residual, w1, b1, w2, b2, gamma, beta = args
    wg, bg, ln = pack_glu_layernorm_params(w1, b1, w2, b2, gamma, beta)  # packed once
    out = jax.block_until_ready(gate_add_norm(x, residual, wg, bg, ln, row_tile=row_tile))
    ref = _reference(x, residual, w1, b1, w2, b2, gamma, beta)
    assert out.shape == x.shape
    err = float(jnp.max(jnp.abs(out - ref)))
    assert jnp.allclose(out, ref, atol=atol, rtol=rtol), f"mismatch vs reference, max|err|={err}"


if __name__ == "__main__":
    key = jax.random.PRNGKey(0)
    k0, k1, k2 = jax.random.split(key, 3)

    # Case 1: D padded 32 -> 128, N=16 -> 2-step row grid (min-two-steps rule).
    _check(_make_inputs(k0, 2, 8, 32))

    # Case 2: N=160 with row_tile=64 -> 3 grid steps, masked partial last row block.
    _check(_make_inputs(k1, 4, 40, 32), row_tile=64)

    # Case 3: D=128 (no feature padding), N=24 -> partial last row block.
    _check(_make_inputs(k2, 2, 12, 128))

    print("KERNEL_OK")
</pallas_src>

<mosaic_0001>
module attributes {stable_mosaic.version = 11 : i64} {
  func.func @_gate_add_norm_kernel(%arg0: i32, %arg1: memref<8x128xf32, #tpu.memory_space<vmem>>, %arg2: memref<8x128xf32, #tpu.memory_space<vmem>>, %arg3: memref<128x256xbf16, #tpu.memory_space<vmem>>, %arg4: memref<1x256xf32, #tpu.memory_space<vmem>>, %arg5: memref<2x128xf32, #tpu.memory_space<vmem>>, %arg6: memref<8x128xf32, #tpu.memory_space<vmem>>) attributes {dimension_semantics = [#tpu.dimension_semantics<parallel>], iteration_bounds = array<i64: 2>, scalar_prefetch = 0 : i64, scratch_operands = 0 : i64, tpu.core_type = #tpu.core_type<tc>, window_params = [{transform_indices = @transform_0, window_bounds = array<i64: 8, 128>}, {transform_indices = @transform_1, window_bounds = array<i64: 8, 128>}, {pipeline_mode = #tpu.pipeline_mode<synchronous>, transform_indices = @transform_2, window_bounds = array<i64: 128, 256>}, {pipeline_mode = #tpu.pipeline_mode<synchronous>, transform_indices = @transform_3, window_bounds = array<i64: 1, 256>}, {pipeline_mode = #tpu.pipeline_mode<synchronous>, transform_indices = @transform_4, window_bounds = array<i64: 2, 128>}, {transform_indices = @transform_5, window_bounds = array<i64: 8, 128>}]} {
    %c0 = arith.constant 0 : index
    %c0_0 = arith.constant 0 : index
    %0 = vector.load %arg1[%c0, %c0_0] : memref<8x128xf32, #tpu.memory_space<vmem>>, vector<8x128xf32>
    %1 = arith.truncf %0 : vector<8x128xf32> to vector<8x128xbf16>
    %c0_1 = arith.constant 0 : index
    %c0_2 = arith.constant 0 : index
    %2 = vector.load %arg3[%c0_1, %c0_2] : memref<128x256xbf16, #tpu.memory_space<vmem>>, vector<128x256xbf16>
    %cst = arith.constant dense<0.000000e+00> : vector<8x256xf32>
    %3 = tpu.matmul %1, %2, %cst {dimension_numbers = #tpu.dot_dimension_numbers<[1], [0], [0], [1], [0, 0, 1, 1], [], []>} : vector<8x128xbf16>, vector<128x256xbf16>, vector<8x256xf32> -> vector<8x256xf32>
    %c0_3 = arith.constant 0 : index
    %c0_4 = arith.constant 0 : index
    %4 = vector.load %arg4[%c0_3, %c0_4] : memref<1x256xf32, #tpu.memory_space<vmem>>, vector<1x256xf32>
    %5 = vector.broadcast %4 : vector<1x256xf32> to vector<8x256xf32>
    %6 = arith.addf %3, %5 : vector<8x256xf32>
    %7 = vector.extract_strided_slice %6 {offsets = [0, 0], sizes = [8, 128], strides = [1, 1]} : vector<8x256xf32> to vector<8x128xf32>
    %8 = arith.negf %7 : vector<8x128xf32>
    %9 = math.exp %8 : vector<8x128xf32>
    %cst_5 = arith.constant 1.000000e+00 : f32
    %10 = vector.broadcast %cst_5 : f32 to vector<8x128xf32>
    %11 = arith.addf %10, %9 : vector<8x128xf32>
    %12 = arith.divf %10, %11 : vector<8x128xf32>
    %13 = vector.extract_strided_slice %6 {offsets = [0, 128], sizes = [8, 128], strides = [1, 1]} : vector<8x256xf32> to vector<8x128xf32>
    %14 = arith.mulf %12, %13 : vector<8x128xf32>
    %c0_6 = arith.constant 0 : index
    %c0_7 = arith.constant 0 : index
    %15 = vector.load %arg2[%c0_6, %c0_7] : memref<8x128xf32, #tpu.memory_space<vmem>>, vector<8x128xf32>
    %16 = arith.addf %14, %15 : vector<8x128xf32>
    %cst_8 = arith.constant dense<0.000000e+00> : vector<8xf32>
    %17 = vector.multi_reduction <add>, %16, %cst_8 [1] : vector<8x128xf32> to vector<8xf32>
    %18 = vector.shape_cast %17 : vector<8xf32> to vector<8x1xf32>
    %19 = arith.mulf %16, %16 : vector<8x128xf32>
    %cst_9 = arith.constant dense<0.000000e+00> : vector<8xf32>
    %20 = vector.multi_reduction <add>, %19, %cst_9 [1] : vector<8x128xf32> to vector<8xf32>
    %21 = vector.shape_cast %20 : vector<8xf32> to vector<8x1xf32>
    %cst_10 = arith.constant 3.125000e-02 : f32
    %22 = vector.broadcast %cst_10 : f32 to vector<8x1xf32>
    %23 = arith.mulf %18, %22 : vector<8x1xf32>
    %cst_11 = arith.constant 3.125000e-02 : f32
    %24 = vector.broadcast %cst_11 : f32 to vector<8x1xf32>
    %25 = arith.mulf %21, %24 : vector<8x1xf32>
    %26 = arith.mulf %23, %23 : vector<8x1xf32>
    %27 = arith.subf %25, %26 : vector<8x1xf32>
    %cst_12 = arith.constant 0.000000e+00 : f32
    %28 = vector.broadcast %cst_12 : f32 to vector<8x1xf32>
    %29 = arith.maximumf %27, %28 : vector<8x1xf32>
    %30 = vector.broadcast %23 : vector<8x1xf32> to vector<8x128xf32>
    %31 = arith.subf %16, %30 : vector<8x128xf32>
    %cst_13 = arith.constant 9.99999974E-6 : f32
    %32 = vector.broadcast %cst_13 : f32 to vector<8x1xf32>
    %33 = arith.addf %29, %32 : vector<8x1xf32>
    %34 = math.rsqrt %33 : vector<8x1xf32>
    %35 = vector.broadcast %34 : vector<8x1xf32> to vector<8x128xf32>
    %36 = arith.mulf %31, %35 : vector<8x128xf32>
    %c0_14 = arith.constant 0 : index
    %c0_15 = arith.constant 0 : index
    %37 = vector.load %arg5[%c0_14, %c0_15] : memref<2x128xf32, #tpu.memory_space<vmem>>, vector<1x128xf32>
    %38 = vector.broadcast %37 : vector<1x128xf32> to vector<8x128xf32>
    %39 = arith.mulf %36, %38 : vector<8x128xf32>
    %c1 = arith.constant 1 : index
    %c0_16 = arith.constant 0 : index
    %40 = vector.load %arg5[%c1, %c0_16] : memref<2x128xf32, #tpu.memory_space<vmem>>, vector<1x128xf32>
    %41 = vector.broadcast %40 : vector<1x128xf32> to vector<8x128xf32>
    %42 = arith.addf %39, %41 : vector<8x128xf32>
    %c0_17 = arith.constant 0 : index
    %c0_18 = arith.constant 0 : index
    %43 = vector.load %arg6[%c0_17, %c0_18] : memref<8x128xf32, #tpu.memory_space<vmem>>, vector<8x128xf32>
    tpu.vector_store %arg6[%c0_17, %c0_18], %42 {strides = array<i32>} : memref<8x128xf32, #tpu.memory_space<vmem>>, vector<8x128xf32>,
    return
  }
  func.func @transform_0(%arg0: i32) -> (i32, i32) {
    %c0_i32 = arith.constant 0 : i32
    %c0_i32_0 = arith.constant 0 : i32
    return %arg0, %c0_i32 : i32, i32
  }
  func.func @transform_1(%arg0: i32) -> (i32, i32) {
    %c0_i32 = arith.constant 0 : i32
    %c0_i32_0 = arith.constant 0 : i32
    return %arg0, %c0_i32 : i32, i32
  }
  func.func @transform_2(%arg0: i32) -> (i32, i32) {
    %c0_i32 = arith.constant 0 : i32
    %c0_i32_0 = arith.constant 0 : i32
    %c0_i32_1 = arith.constant 0 : i32
    return %c0_i32, %c0_i32_0 : i32, i32
  }
  func.func @transform_3(%arg0: i32) -> (i32, i32) {
    %c0_i32 = arith.constant 0 : i32
    %c0_i32_0 = arith.constant 0 : i32
    %c0_i32_1 = arith.constant 0 : i32
    return %c0_i32, %c0_i32_0 : i32, i32
  }
  func.func @transform_4(%arg0: i32) -> (i32, i32) {
    %c0_i32 = arith.constant 0 : i32
    %c0_i32_0 = arith.constant 0 : i32
    %c0_i32_1 = arith.constant 0 : i32
    return %c0_i32, %c0_i32_0 : i32, i32
  }
  func.func @transform_5(%arg0: i32) -> (i32, i32) {
    %c0_i32 = arith.constant 0 : i32
    %c0_i32_0 = arith.constant 0 : i32
    return %arg0, %c0_i32 : i32, i32
  }
}

</mosaic_0001>

<llo_original>
// kernel: gate_add_norm.1
$region0: #{gate_add_norm.1}
  #allocation0 [shape = 'u32[]', space=smem, size = 0x4, offset = 0x4, fixed_abs, tag = 'smem constant byte address 0x4 - core index']
  #allocation1 [shape = 'u32[72,128]{1,0:T(1,128)}', space=vmem, size = 0x9000, scoped, tag = 'internal scratch']
  %s0 = inlined_call_operand.vmem [shape: f32[16,128], index: 0, kind: input, shape index: {}]
  %s1 = inlined_call_operand.vmem [shape: f32[16,128], index: 1, kind: input, shape index: {}]
  %s2 = inlined_call_operand.hbm [shape: bf16[128,256], index: 2, kind: input, shape index: {}]
  %s3 = inlined_call_operand.vmem [shape: f32[1,256], index: 3, kind: input, shape index: {}]
  %s4 = inlined_call_operand.vmem [shape: f32[2,128], index: 4, kind: input, shape index: {}]
  %s5 = inlined_call_operand.vmem [shape: f32[16,128], index: 5, kind: output, shape index: {}]
  %s6 = sld [smem:[#allocation0]]
  $region57: #{gate_add_norm.1} parent=0
    _
  %s8 = ssub.s32 1, %s6
  %s9 = scalar_select 0, %s8, %s6
  $region1: #{gate_add_norm.1} parent=0
    #allocation2 [shape = 'u8[65536]{0}', space=vmem, size = 0x10000, scoped, tag = 'input window, operand 2, single buffered']
    #allocation3 [shape = 's32[2]{0}', space=sflag, size = 0x8, scoped, tag = 'scoped memory for gate_add_norm.1']
    %10 = vsyncpa [#allocation3], 0
    loop: start=0, step=1, limit=4
    $region2: #{gate_add_norm.1} parent=1 // loop_pre_header
      _
    $region3: #{gate_add_norm.1} parent=1 // loop_header
      %s12 = sphi 0, %s16
      %p13 = scmp.ge.s32.totalorder %s12, 4
      %s22 = sphi 0, %s24
      %s25 = sphi 0, %s22
      %s26 = sphi 0, %s25
      %s42 = sphi 0, %s26
      %s48 = sphi 0, %s50
      %s51 = sphi 0, %s48
      %s52 = sphi 0, %s51
      %s68 = sphi 0, %s52
      %s72 = sphi 0, %s72
      %s74 = sphi 0, %s72
      %s75 = sphi 0, %s74
      %s89 = sphi 0, %s75
      %s93 = sphi 0, %s93
      %s95 = sphi 0, %s93
      %s96 = sphi 0, %s95
      %s110 = sphi 0, %s96
      %s114 = sphi 0, %s114
      %s116 = sphi 0, %s114
      %s117 = sphi 0, %s116
      %s131 = sphi 0, %s117
      %s137 = sphi 0, %s139
      %s140 = sphi 0, %s137
      %s141 = sphi 0, %s140
      %s157 = sphi 0, %s141
    $region4: #{gate_add_norm.1} parent=1 // loop_header_branch
      %15 = sbr.rel (%p13) target = $region8
    $region5: #{gate_add_norm.1} parent=1 // loop_body
      %s17 = ssub.s32 %s12, 1
      %s18 = ssub.s32 %s12, 2
      %s19 = sadd.s32 %s12, 1
      %s20 = ssub.s32 %s12, %s19
      %p21 = scmp.eq.s32.totalorder %s20, 0
      %s23 = sadd.s32 %s22, 1
      %s24 = scalar_select %p21, %s22, %s23
      %p27 = pneg %p21
      %p28 = scmp.eq.s32.totalorder %s12, 1
      %p29 = por %p27, %p28
      %p30 = scmp.ne.s32.totalorder %s22, %s25
      %p31 = scmp.eq.s32.totalorder %s12, 0
      %p32 = por %p30, %p31
      %p33 = scmp.ne.s32.totalorder %s22, %s25
      %p34 = scmp.eq.s32.totalorder %s17, 1
      %p35 = por %p33, %p34
      %p36 = scmp.ne.s32.totalorder %s25, %s26
      %p37 = scmp.eq.s32.totalorder %s17, 0
      %p38 = por %p36, %p37
      %p39 = scmp.ne.s32.totalorder %s25, %s26
      %p40 = scmp.eq.s32.totalorder %s18, 1
      %p41 = por %p39, %p40
      %p43 = scmp.ne.s32.totalorder %s26, %s42
      %p44 = scmp.eq.s32.totalorder %s18, 0
      %p45 = por %p43, %p44
      %s46 = ssub.s32 %s12, %s19
      %p47 = scmp.eq.s32.totalorder %s46, 0
      %s49 = sadd.s32 %s48, 1
      %s50 = scalar_select %p47, %s48, %s49
      %p53 = pneg %p47
      %p54 = scmp.eq.s32.totalorder %s12, 1
      %p55 = por %p53, %p54
      %p56 = scmp.ne.s32.totalorder %s48, %s51
      %p57 = scmp.eq.s32.totalorder %s12, 0
      %p58 = por %p56, %p57
      %p59 = scmp.ne.s32.totalorder %s48, %s51
      %p60 = scmp.eq.s32.totalorder %s17, 1
      %p61 = por %p59, %p60
      %p62 = scmp.ne.s32.totalorder %s51, %s52
      %p63 = scmp.eq.s32.totalorder %s17, 0
      %p64 = por %p62, %p63
      %p65 = scmp.ne.s32.totalorder %s51, %s52
      %p66 = scmp.eq.s32.totalorder %s18, 1
      %p67 = por %p65, %p66
      %p69 = scmp.ne.s32.totalorder %s52, %s68
      %p70 = scmp.eq.s32.totalorder %s18, 0
      %p71 = por %p69, %p70
      %s73 = sadd.s32 %s72, 1
      %p76 = scmp.eq.s32.totalorder %s12, 1
      %p77 = scmp.ne.s32.totalorder %s72, %s74
      %p78 = scmp.eq.s32.totalorder %s12, 0
      %p79 = por %p77, %p78
      %p80 = scmp.ne.s32.totalorder %s72, %s74
      %p81 = scmp.eq.s32.totalorder %s17, 1
      %p82 = por %p80, %p81
      %p83 = scmp.ne.s32.totalorder %s74, %s75
      %p84 = scmp.eq.s32.totalorder %s17, 0
      %p85 = por %p83, %p84
      %p86 = scmp.ne.s32.totalorder %s74, %s75
      %p87 = scmp.eq.s32.totalorder %s18, 1
      %p88 = por %p86, %p87
      %p90 = scmp.ne.s32.totalorder %s75, %s89
      %p91 = scmp.eq.s32.totalorder %s18, 0
      %p92 = por %p90, %p91
      %s94 = sadd.s32 %s93, 1
      %p97 = scmp.eq.s32.totalorder %s12, 1
      %p98 = scmp.ne.s32.totalorder %s93, %s95
      %p99 = scmp.eq.s32.totalorder %s12, 0
      %p100 = por %p98, %p99
      %p101 = scmp.ne.s32.totalorder %s93, %s95
      %p102 = scmp.eq.s32.totalorder %s17, 1
      %p103 = por %p101, %p102
      %p104 = scmp.ne.s32.totalorder %s95, %s96
      %p105 = scmp.eq.s32.totalorder %s17, 0
      %p106 = por %p104, %p105
      %p107 = scmp.ne.s32.totalorder %s95, %s96
      %p108 = scmp.eq.s32.totalorder %s18, 1
      %p109 = por %p107, %p108
      %p111 = scmp.ne.s32.totalorder %s96, %s110
      %p112 = scmp.eq.s32.totalorder %s18, 0
      %p113 = por %p111, %p112
      %s115 = sadd.s32 %s114, 1
      %p118 = scmp.eq.s32.totalorder %s12, 1
      %p119 = scmp.ne.s32.totalorder %s114, %s116
      %p120 = scmp.eq.s32.totalorder %s12, 0
      %p121 = por %p119, %p120
      %p122 = scmp.ne.s32.totalorder %s114, %s116
      %p123 = scmp.eq.s32.totalorder %s17, 1
      %p124 = por %p122, %p123
      %p125 = scmp.ne.s32.totalorder %s116, %s117
      %p126 = scmp.eq.s32.totalorder %s17, 0
      %p127 = por %p125, %p126
      %p128 = scmp.ne.s32.totalorder %s116, %s117
      %p129 = scmp.eq.s32.totalorder %s18, 1
      %p130 = por %p128, %p129
      %p132 = scmp.ne.s32.totalorder %s117, %s131
      %p133 = scmp.eq.s32.totalorder %s18, 0
      %p134 = por %p132, %p133
      %s135 = ssub.s32 %s12, %s19
      %p136 = scmp.eq.s32.totalorder %s135, 0
      %s138 = sadd.s32 %s137, 1
      %s139 = scalar_select %p136, %s137, %s138
      %p142 = pneg %p136
      %p143 = scmp.eq.s32.totalorder %s12, 1
      %p144 = por %p142, %p143
      %p145 = scmp.ne.s32.totalorder %s137, %s140
      %p146 = scmp.eq.s32.totalorder %s12, 0
      %p147 = por %p145, %p146
      %p148 = scmp.ne.s32.totalorder %s137, %s140
      %p149 = scmp.eq.s32.totalorder %s17, 1
      %p150 = por %p148, %p149
      %p151 = scmp.ne.s32.totalorder %s140, %s141
      %p152 = scmp.eq.s32.totalorder %s17, 0
      %p153 = por %p151, %p152
      %p154 = scmp.ne.s32.totalorder %s140, %s141
      %p155 = scmp.eq.s32.totalorder %s18, 1
      %p156 = por %p154, %p155
      %p158 = scmp.ne.s32.totalorder %s141, %s157
      %p159 = scmp.eq.s32.totalorder %s18, 0
      %p160 = por %p158, %p159
      %p161 = scmp.le.s32.totalorder 1, %s12
      %p162 = scmp.lt.s32.totalorder %s12, 3
      %p163 = pnand %p161, %p162
      %p164 = pneg %p163
      // Predicated region
      $region9: #{gate_add_norm.1} parent=5 // pred_check
        _
      $region10: #{gate_add_norm.1} parent=5 // pred_check_branch
        %166 = sbr.rel (%p163) target = $region12
      $region11: #{gate_add_norm.1} parent=5 // pred_region
        %s167 = ssub.s32 %s12, 1
        // Predicated region
        $region13: #{gate_add_norm.1} parent=11 // pred_check
          %p168 = pneg %p85
        $region14: #{gate_add_norm.1} parent=11 // pred_check_branch
          %170 = sbr.rel (%p168) target = $region16
        $region15: #{gate_add_norm.1} parent=11 // pred_region
          %172 = vsyncadd [#allocation3], 0
          %s173 = sshll.u32 %s2, 4
          %s174 = int_to_ptr.hbm [resolvable:$true] %s173
          %s175 = sshll.u32 [#allocation2], 4
          %s176 = int_to_ptr.vmem [resolvable:$true] %s175
          %181 = dma.hbm_to_vmem [thread:$0]  %s174, 2048, %s176, [#allocation3], 128, 128, 8
        $region16: #{gate_add_norm.1} parent=11 // pred_fallthru
          _
        // Predicated region
        $region17: #{gate_add_norm.1} parent=11 // pred_check
          %p182 = pneg %p106
        $region18: #{gate_add_norm.1} parent=11 // pred_check_branch
          %184 = sbr.rel (%p182) target = $region20
        $region19: #{gate_add_norm.1} parent=11 // pred_region
          _
        $region20: #{gate_add_norm.1} parent=11 // pred_fallthru
          _
        // Predicated region
        $region21: #{gate_add_norm.1} parent=11 // pred_check
          %p185 = pneg %p127
        $region22: #{gate_add_norm.1} parent=11 // pred_check_branch
          %187 = sbr.rel (%p185) target = $region24
        $region23: #{gate_add_norm.1} parent=11 // pred_region
          _
        $region24: #{gate_add_norm.1} parent=11 // pred_fallthru
          _
      $region12: #{gate_add_norm.1} parent=5 // pred_fallthru
        _
      %p188 = scmp.lt.s32.totalorder %s12, 2
      // Predicated region
      $region25: #{gate_add_norm.1} parent=5 // pred_check
        %p189 = pneg %p188
      $region26: #{gate_add_norm.1} parent=5 // pred_check_branch
        %191 = sbr.rel (%p189) target = $region28
      $region27: #{gate_add_norm.1} parent=5 // pred_region
        // Predicated region
        $region29: #{gate_add_norm.1} parent=27 // pred_check
          %p192 = pneg %p32
        $region30: #{gate_add_norm.1} parent=27 // pred_check_branch
          %194 = sbr.rel (%p192) target = $region32
        $region31: #{gate_add_norm.1} parent=27 // pred_region
          %p195 = scmp.lt.s32.totalorder %s12, 1
          %s196 = scalar_select %p195, %s12, 1
          %s197 = smul.addr %s196, 8
          %s198 = scalar_lea.vmem %s0, %s197
        $region32: #{gate_add_norm.1} parent=27 // pred_fallthru
          _
        // Predicated region
        $region33: #{gate_add_norm.1} parent=27 // pred_check
          %p199 = pneg %p58
        $region34: #{gate_add_norm.1} parent=27 // pred_check_branch
          %201 = sbr.rel (%p199) target = $region36
        $region35: #{gate_add_norm.1} parent=27 // pred_region
          %p202 = scmp.lt.s32.totalorder %s12, 1
          %s203 = scalar_select %p202, %s12, 1
          %s204 = smul.addr %s203, 8
          %s205 = scalar_lea.vmem %s1, %s204
        $region36: #{gate_add_norm.1} parent=27 // pred_fallthru
          _
      $region28: #{gate_add_norm.1} parent=5 // pred_fallthru
        _
      %p206 = scmp.le.s32.totalorder 1, %s12
      %p207 = scmp.lt.s32.totalorder %s12, 3
      %p208 = pnand %p206, %p207
      %p209 = pneg %p208
      // Predicated region
      $region37: #{gate_add_norm.1} parent=5 // pred_check
        _
      $region38: #{gate_add_norm.1} parent=5 // pred_check_branch
        %211 = sbr.rel (%p208) target = $region40
      $region39: #{gate_add_norm.1} parent=5 // pred_region
        %s212 = ssub.s32 %s12, 1
        // Predicated region
        $region41: #{gate_add_norm.1} parent=39 // pred_check
          %p213 = pneg %p85
        $region42: #{gate_add_norm.1} parent=39 // pred_check_branch
          %215 = sbr.rel (%p213) target = $region44
        $region43: #{gate_add_norm.1} parent=39 // pred_region
          %217 = dma.done [#allocation3], 2048
        $region44: #{gate_add_norm.1} parent=39 // pred_fallthru
          _
        %p218 = scmp.lt.s32.totalorder %s17, 1
        %s219 = scalar_select %p218, %s17, 1
        %s220 = smul.addr %s219, 8
        %s221 = scalar_lea.vmem %s0, %s220
        %p222 = pneg %p38
        %p223 = pneg %p35
        %p224 = scmp.lt.s32.totalorder %s17, 1
        %s225 = scalar_select %p224, %s17, 1
        %s226 = smul.addr %s225, 8
        %s227 = scalar_lea.vmem %s1, %s226
        %p228 = pneg %p64
        %p229 = pneg %p61
        %p230 = pneg %p85
        %p231 = pneg %p82
        %p232 = pneg %p106
        %p233 = pneg %p103
        %p234 = pneg %p127
        %p235 = pneg %p124
        %p236 = pneg %p153
        %p237 = pneg %p150
        %p238 = scmp.lt.s32.totalorder %s17, 1
        %s239 = scalar_select %p238, %s17, 1
        %s240 = smul.addr %s239, 8
        %s241 = scalar_lea.vmem %s5, %s240
        %p242 = scmp.lt.s32.totalorder %s17, 1
        %s243 = scalar_select %p242, %s17, 1
        %s244 = smul.addr %s243, 8
        %s245 = scalar_lea.vmem %s0, %s244
        %p246 = scmp.lt.s32.totalorder %s17, 1
        %s247 = scalar_select %p246, %s17, 1
        %s248 = smul.addr %s247, 8
        %s249 = scalar_lea.vmem %s1, %s248
        %p250 = scmp.lt.s32.totalorder %s17, 1
        %s251 = scalar_select %p250, %s17, 1
        %s252 = smul.addr %s251, 8
        %s253 = scalar_lea.vmem %s5, %s252
        %v254 = vld [vmem:[%s245] sm:$0xff]
        %v255 = vpack.c.bf16 %v254, %v254
        %v256 = vld [vmem:[#allocation2] sm:$0xff]
        %v257 = vld [vmem:[#allocation2 + $0x8] sm:$0xff]
        %v258 = vld [vmem:[#allocation2 + $0x10] sm:$0xff]
        %v259 = vld [vmem:[#allocation2 + $0x18] sm:$0xff]
        %v260 = vld [vmem:[#allocation2 + $0x20] sm:$0xff]
        %v261 = vld [vmem:[#allocation2 + $0x28] sm:$0xff]
        %v262 = vld [vmem:[#allocation2 + $0x30] sm:$0xff]
        %v263 = vld [vmem:[#allocation2 + $0x38] sm:$0xff]
        %v264 = vld [vmem:[#allocation2 + $0x40] sm:$0xff]
        %v265 = vld [vmem:[#allocation2 + $0x48] sm:$0xff]
        %v266 = vld [vmem:[#allocation2 + $0x50] sm:$0xff]
        %v267 = vld [vmem:[#allocation2 + $0x58] sm:$0xff]
        %v268 = vld [vmem:[#allocation2 + $0x60] sm:$0xff]
        %v269 = vld [vmem:[#allocation2 + $0x68] sm:$0xff]
        %v270 = vld [vmem:[#allocation2 + $0x70] sm:$0xff]
        %v271 = vld [vmem:[#allocation2 + $0x78] sm:$0xff]
        %v272 = vld [vmem:[%s3] sm:$0x3]
        %v274 = vperm.slane %v272, 0
        %v275 = vperm.slane %v272, 1
        %v294 = vunpack.c.l.b16 %v256
        %v295 = vunpack.c.h.b16 %v256
        %v296 = vunpack.c.l.b16 %v257
        %v297 = vunpack.c.h.b16 %v257
        %v298 = vunpack.c.l.b16 %v258
        %v299 = vunpack.c.h.b16 %v258
        %v300 = vunpack.c.l.b16 %v259
        %v301 = vunpack.c.h.b16 %v259
        %v302 = vunpack.c.l.b16 %v260
        %v303 = vunpack.c.h.b16 %v260
        %v304 = vunpack.c.l.b16 %v261
        %v305 = vunpack.c.h.b16 %v261
        %v306 = vunpack.c.l.b16 %v262
        %v307 = vunpack.c.h.b16 %v262
        %v308 = vunpack.c.l.b16 %v263
        %v309 = vunpack.c.h.b16 %v263
        %v310 = vunpack.c.l.b16 %v264
        %v311 = vunpack.c.h.b16 %v264
        %v312 = vunpack.c.l.b16 %v265
        %v313 = vunpack.c.h.b16 %v265
        %v314 = vunpack.c.l.b16 %v266
        %v315 = vunpack.c.h.b16 %v266
        %v316 = vunpack.c.l.b16 %v267
        %v317 = vunpack.c.h.b16 %v267
        %v318 = vunpack.c.l.b16 %v268
        %v319 = vunpack.c.h.b16 %v268
        %v320 = vunpack.c.l.b16 %v269
        %v321 = vunpack.c.h.b16 %v269
        %v322 = vunpack.c.l.b16 %v270
        %v323 = vunpack.c.h.b16 %v270
        %v324 = vunpack.c.l.b16 %v271
        %v325 = vunpack.c.h.b16 %v271
        %v326 = vpack.c.b16 %v296, %v294
        %v327 = vpack.c.b16 %v297, %v295
        %v328 = vpack.c.b16 %v300, %v298
        %v329 = vpack.c.b16 %v301, %v299
        %v330 = vpack.c.b16 %v304, %v302
        %v331 = vpack.c.b16 %v305, %v303
        %v332 = vpack.c.b16 %v308, %v306
        %v333 = vpack.c.b16 %v309, %v307
        %v334 = vpack.c.b16 %v312, %v310
        %v335 = vpack.c.b16 %v313, %v311
        %v336 = vpack.c.b16 %v316, %v314
        %v337 = vpack.c.b16 %v317, %v315
        %v338 = vpack.c.b16 %v320, %v318
        %v339 = vpack.c.b16 %v321, %v319
        %v340 = vpack.c.b16 %v324, %v322
        %v341 = vpack.c.b16 %v325, %v323
        %358 = vmatpush.bf16.msra.mxu0 %v340
        %359 = vmatpush.bf16.msra.mxu0 %v338
        %360 = vmatpush.bf16.msra.mxu0 %v336
        %361 = vmatpush.bf16.msra.mxu0 %v334
        %362 = vmatpush.bf16.msra.mxu0 %v332
        %363 = vmatpush.bf16.msra.mxu0 %v330
        %364 = vmatpush.bf16.msra.mxu0 %v328
        %365 = vmatpush.bf16.msra.mxu0 %v326
        %366 = vmatmul.bf16.gmra.mxu0 %v255
        %v367 = vpop.f32.mrf.mxu0
        %v368 = vadd.f32 %v274, %v367
        %v369 = vpop.f32.mrf.mxu0
        %370 = vdwg.mxu0
        %371 = vmatpush.bf16.msra.mxu0 %v341
        %372 = vmatpush.bf16.msra.mxu0 %v339
        %373 = vmatpush.bf16.msra.mxu0 %v337
        %374 = vmatpush.bf16.msra.mxu0 %v335
        %375 = vmatpush.bf16.msra.mxu0 %v333
        %376 = vmatpush.bf16.msra.mxu0 %v331
        %377 = vmatpush.bf16.msra.mxu0 %v329
        %378 = vmatpush.bf16.msra.mxu0 %v327
        %379 = vmatmul.bf16.gmra.mxu0 %v255
        %v380 = vpop.f32.mrf.mxu0
        %v381 = vadd.f32 %v275, %v380
        %v382 = vpop.f32.mrf.mxu0
        %383 = vdwg.mxu0
        %v384 = vxor.u32 %v368, 2147483648
        %v385 = vmul.f32 %v384, 1.442695
        %v386 = vpow.pop %v385
        %v387 = vadd.f32 %v386, 1.0
        %v388 = vrcp.pop %v387
        %v389 = vmul.f32 %v387, %v388
        %v390 = vsub.f32 1.0, %v389
        %v391 = vmul.f32 %v388, %v390
        %v392 = vadd.f32 %v388, %v391
        %vm393 = vweird.f32 %v387
        %vm394 = vweird.f32 %v388
        %vm395 = vmor %vm393, %vm394
        %v396 = vsel %vm395, %v388, %v392
        %v397 = vand.u32 2147483647, %v387
        %vm398 = vcmp.eq.f32.partialorder %v397, 8.507059e+37
        %v399 = vand.u32 %v387, 2147483648
        %v400 = vor.u32 1.1754944e-38, %v399
        %v401 = vsel %vm398, %v400, %v396
        %v402 = vmul.f32 1.0, %v401
        %v403 = vmul.f32 %v402, %v381
        %v404 = vld [vmem:[%s249] sm:$0xff]
        %v405 = vadd.f32 %v403, %v404
        %406 = vadd.xlane.f32.xlu0 %v405
        %v407 = vpop.xlane.xlu0 %406
        %v408 = vmul.f32 %v405, %v405
        %409 = vadd.xlane.f32.xlu0 %v408
        %v410 = vpop.xlane.xlu0 %409
        %v411 = vmul.f32 %v407, 0.03125
        %v412 = vmul.f32 %v410, 0.03125
        %v413 = vmul.f32 %v411, %v411
        %v414 = vsub.f32 %v412, %v413
        %v415 = vmax.f32 %v414, 0.0
        %v416 = vsub.f32 %v405, %v411
        %v417 = vadd.f32 %v415, 1e-05
        %v418 = vrsqrt.pop %v417
        %v419 = vmul.f32 %v418, %v417
        %v420 = vmul.f32 %v419, %v418
        %v421 = vmul.f32 0.5, %v420
        %v422 = vsub.f32 1.5, %v421
        %v423 = vmul.f32 %v418, %v422
        %vm424 = vweird.f32 %v417
        %vm425 = vweird.f32 %v418
        %vm426 = vmor %vm424, %vm425
        %v427 = vsel %vm426, %v418, %v423
        %v428 = vmul.f32 %v416, %v427
        %v429 = vld [vmem:[%s4] sm:$0x1]
        %v430 = vperm.slane %v429, 0
        %v431 = vmul.f32 %v428, %v430
        %v432 = vld [vmem:[%s4 + $0x1] sm:$0x1]
        %v433 = vperm.slane %v432, 0
        %v434 = vadd.f32 %v431, %v433
        %435 = vst [vmem:[%s253] sm:$0xff] %v434
        %p436 = scmp.lt.s32.totalorder %s17, 1
        %s437 = scalar_select %p436, %s17, 1
        %s438 = smul.addr %s437, 8
        %s439 = scalar_lea.vmem %s5, %s438
        // Predicated region
        $region45: #{gate_add_norm.1} parent=39 // pred_check
          %p440 = pneg %p150
        $region46: #{gate_add_norm.1} parent=39 // pred_check_branch
          %442 = sbr.rel (%p440) target = $region48
        $region47: #{gate_add_norm.1} parent=39 // pred_region
          _
        $region48: #{gate_add_norm.1} parent=39 // pred_fallthru
          _
      $region40: #{gate_add_norm.1} parent=5 // pred_fallthru
        _
      %p443 = scmp.le.s32.totalorder 2, %s12
      // Predicated region
      $region49: #{gate_add_norm.1} parent=5 // pred_check
        %p444 = pneg %p443
      $region50: #{gate_add_norm.1} parent=5 // pred_check_branch
        %446 = sbr.rel (%p444) target = $region52
      $region51: #{gate_add_norm.1} parent=5 // pred_region
        %s447 = ssub.s32 %s12, 2
        // Predicated region
        $region53: #{gate_add_norm.1} parent=51 // pred_check
          %p448 = pneg %p156
        $region54: #{gate_add_norm.1} parent=51 // pred_check_branch
          %450 = sbr.rel (%p448) target = $region56
        $region55: #{gate_add_norm.1} parent=51 // pred_region
          %p451 = scmp.lt.s32.totalorder %s18, 1
          %s452 = scalar_select %p451, %s18, 1
          %s453 = smul.addr %s452, 8
          %s454 = scalar_lea.vmem %s5, %s453
        $region56: #{gate_add_norm.1} parent=51 // pred_fallthru
          _
      $region52: #{gate_add_norm.1} parent=5 // pred_fallthru
        _
    $region6: #{gate_add_norm.1} parent=1 // loop_footer
      %s16 = sadd.s32 1, %s12
    $region7: #{gate_add_norm.1} parent=1 // loop_footer_branch
      %11 = sbr.rel target = $region3
    $region8: #{gate_add_norm.1} parent=1 // loop_exit
      _
    %455 = vsyncpa [#allocation3], 1
    %s456 = scalar_lea.sflag [#allocation3], 1
    %457 = vsyncpa %s456, 1

</llo_original>
